<compile_context>
chip_gen: v7x
topology: tpu7x:2x2x1
jax: 0.10.0
libtpu: 0.0.40
codegen_flags: <defaults>
</compile_context>

<pallas_src>
import math

import jax
import jax.numpy as jnp
from jax.experimental import pallas as pl
from jax.experimental.pallas import tpu as pltpu


def _round_up(x, m):
    return (x + m - 1) // m * m


def _cdiv(a, b):
    return -(-a // b)


_GELU_C = math.sqrt(2.0 / math.pi)


def _gelu_tanh(x):
    # PyTorch nn.GELU(approximate='tanh'): 0.5*x*(1 + tanh(sqrt(2/pi)*(x + 0.044715*x^3)))
    x2 = x * x
    return 0.5 * x * (1.0 + jnp.tanh(_GELU_C * (x + 0.044715 * (x * x2))))


# -------------------------------------------------------------------------------------------------
# Kernels
# -------------------------------------------------------------------------------------------------
def mlp_kernel_resident(x_ref, w1_ref, b1_ref, w2_ref, b2_ref, o_ref):
    """Full (padded) hidden dim resident in VMEM: grid is (n_m,), no accumulator scratch."""
    h = jnp.dot(x_ref[...], w1_ref[...], preferred_element_type=jnp.float32)
    h = _gelu_tanh(h + b1_ref[...].astype(jnp.float32))
    # dropout(drop_rate=0.0) == nn.Identity -> nothing to do.
    out = jnp.dot(h.astype(w2_ref.dtype), w2_ref[...], preferred_element_type=jnp.float32)
    o_ref[...] = (out + b2_ref[...].astype(jnp.float32)).astype(o_ref.dtype)


def mlp_kernel_streamed(x_ref, w1_ref, b1_ref, w2_ref, b2_ref, o_ref, acc_ref):
    """Hidden dim tiled along grid axis 1 (reduction); f32 accumulator in VMEM scratch."""
    h_idx = pl.program_id(1)

    h = jnp.dot(x_ref[...], w1_ref[...], preferred_element_type=jnp.float32)
    h = _gelu_tanh(h + b1_ref[...].astype(jnp.float32))
    part = jnp.dot(h.astype(w2_ref.dtype), w2_ref[...], preferred_element_type=jnp.float32)

    @pl.when(h_idx == 0)
    def _():
        acc_ref[...] = part          # first partial product: direct store, no zeros init

    @pl.when(h_idx > 0)
    def _():
        acc_ref[...] += part

    @pl.when(h_idx == pl.num_programs(1) - 1)
    def _():
        o_ref[...] = (acc_ref[...] + b2_ref[...].astype(jnp.float32)).astype(o_ref.dtype)


# -------------------------------------------------------------------------------------------------
# Tile selection / VMEM budgeting
# -------------------------------------------------------------------------------------------------
def _vmem_budget_bytes():
    """~85% of this generation's physical VMEM (v5e/v6e: 128 MiB, v7x: 64 MiB)."""
    cap = None
    try:
        cap = getattr(pltpu.get_tpu_info(), "vmem_capacity_bytes", None)
    except Exception:
        cap = None
    if not cap:
        cap = 64 * 1024 * 1024   # conservative (v7x-sized) fallback
    return int(cap * 0.85)


def _tile_footprint(tm, th, E, it_c, it_out, resident):
    b = 2 * tm * E * it_c                # x tile (double-buffered, compute dtype)
    b += 2 * tm * E * it_out             # out tile
    b += 2 * E * th * it_c               # w1 block
    b += 2 * th * E * it_c               # w2 block
    b += 2 * th * 4 + 2 * E * 4          # biases (f32)
    b += tm * th * 6                     # fc1/GELU intermediate (f32 + bf16 copy)
    if not resident:
        b += tm * E * 4                  # f32 accumulator scratch
    return b


def _select_tiles(M, E, H, tm_req, it_c, it_out, budget):
    """Return (tm_eff, th_eff). th_eff == round_up(H, 128) means weight-resident (n_h == 1)."""
    sub = 16 if it_c < 4 else 8          # sublane minimum for the compute dtype
    gran = 256 if H > 128 else 128       # v6e/v7x MXU is 2x256x256; 128 only for small H
    h_full = _round_up(H, 128)

    # M tile: requested size, capped by M, and capped so the parallel axis has >= 2 tiles
    # (keeps v7x's 2 TensorCores busy) whenever M is big enough to split.
    tm = min(_round_up(tm_req, sub), _round_up(M, sub))
    if M > sub:
        tm = min(tm, max(sub, _round_up(_cdiv(M, 2), sub)))
    tm = max(tm, sub)

    # 1) Weight-resident attempt: th = full padded H; shrink tm down to a floor if needed.
    tm_floor = min(tm, max(sub, min(256, _round_up(M, sub))))
    tm_res = tm
    while tm_res > tm_floor and _tile_footprint(tm_res, h_full, E, it_c, it_out, True) > budget:
        tm_res = max(tm_floor, _round_up(tm_res // 2, sub))
    if _tile_footprint(tm_res, h_full, E, it_c, it_out, True) <= budget:
        return tm_res, h_full

    # 2) Streamed weights: start from a 512-ish H tile and shrink th (then tm) until it fits.
    th = min(h_full, _round_up(512, gran))
    while _tile_footprint(tm, th, E, it_c, it_out, False) > budget:
        if th > gran:
            th = max(gran, _round_up(th // 2, gran))
        elif tm > sub:
            tm = max(sub, _round_up(tm // 2, sub))
        else:
            # TODO(synk): tile the embed dim E as well for extremely large E; minimum tiles here.
            break
    return tm, th


# -------------------------------------------------------------------------------------------------
# Wrapper
# -------------------------------------------------------------------------------------------------
def mlp_forward(x, w1, b1, w2, b2, *, tm=1024, compute_dtype=jnp.bfloat16):
    """x: (..., E); w1: (E, H); b1: (H,); w2: (H, E); b2: (E,).  Returns (..., E)."""
    orig_shape = x.shape
    E = x.shape[-1]
    H = w1.shape[1]
    M = 1
    for d in x.shape[:-1]:
        M *= d

    out_dtype = x.dtype
    it_c = jnp.dtype(compute_dtype).itemsize
    it_out = jnp.dtype(out_dtype).itemsize

    budget = _vmem_budget_bytes()
    tm_eff, th_eff = _select_tiles(M, E, H, tm, it_c, it_out, budget)
    m_pad = _round_up(M, tm_eff)
    h_pad = _round_up(H, th_eff)
    n_m = m_pad // tm_eff
    n_h = h_pad // th_eff
    resident = (n_h == 1)

    # --- pad (padded hidden cols are harmless: GELU(0)=0 and padded w2 rows are 0; padded M rows
    #     are sliced off) and cast matmul operands to the compute dtype (biases stay f32). --------
    x2 = x.reshape(M, E)
    if m_pad != M:
        x2 = jnp.pad(x2, ((0, m_pad - M), (0, 0)))
    w1p, w2p = w1, w2
    b1p = b1.reshape(1, H)
    if h_pad != H:
        w1p = jnp.pad(w1, ((0, 0), (0, h_pad - H)))
        b1p = jnp.pad(b1p, ((0, 0), (0, h_pad - H)))
        w2p = jnp.pad(w2, ((0, h_pad - H), (0, 0)))
    xc = x2.astype(compute_dtype)
    w1c = w1p.astype(compute_dtype)
    w2c = w2p.astype(compute_dtype)
    b1p = b1p.astype(jnp.float32)
    b2p = b2.reshape(1, E).astype(jnp.float32)

    # --- VMEM limit (footprint-derived, capped by the per-generation budget) ----------------------
    tile_bytes = _tile_footprint(tm_eff, th_eff, E, it_c, it_out, resident)
    vmem_limit = int(min(max(int(tile_bytes * 1.5), 32 * 1024 * 1024), budget))

    weight_bytes = 2 * E * h_pad * it_c
    cost = pl.CostEstimate(
        flops=4 * M * H * E,
        transcendentals=M * H,
        bytes_accessed=int(
            m_pad * E * (it_c + it_out)
            + weight_bytes * (1 if resident else n_m)
            + (h_pad + E) * 4
        ),
    )

    if resident:
        grid = (n_m,)
        kernel = mlp_kernel_resident
        in_specs = [
            pl.BlockSpec((tm_eff, E), lambda i: (i, 0)),       # x tile
            pl.BlockSpec((E, th_eff), lambda i: (0, 0)),       # w1 (resident in VMEM)
            pl.BlockSpec((1, th_eff), lambda i: (0, 0)),       # b1 (resident)
            pl.BlockSpec((th_eff, E), lambda i: (0, 0)),       # w2 (resident)
            pl.BlockSpec((1, E), lambda i: (0, 0)),            # b2
        ]
        out_specs = pl.BlockSpec((tm_eff, E), lambda i: (i, 0))
        scratch_shapes = []
        dim_sem = ("parallel",)
    else:
        grid = (n_m, n_h)
        kernel = mlp_kernel_streamed
        in_specs = [
            pl.BlockSpec((tm_eff, E), lambda i, h: (i, 0)),    # x tile
            pl.BlockSpec((E, th_eff), lambda i, h: (0, h)),    # w1 H-slice
            pl.BlockSpec((1, th_eff), lambda i, h: (0, h)),    # b1 H-slice
            pl.BlockSpec((th_eff, E), lambda i, h: (h, 0)),    # w2 H-slice
            pl.BlockSpec((1, E), lambda i, h: (0, 0)),         # b2
        ]
        out_specs = pl.BlockSpec((tm_eff, E), lambda i, h: (i, 0))
        scratch_shapes = [pltpu.VMEM((tm_eff, E), jnp.float32)]
        dim_sem = ("parallel", "arbitrary")

    out2 = pl.pallas_call(
        kernel,
        out_shape=jax.ShapeDtypeStruct((m_pad, E), out_dtype),
        grid_spec=pltpu.PrefetchScalarGridSpec(
            num_scalar_prefetch=0,
            grid=grid,
            in_specs=in_specs,
            out_specs=out_specs,
            scratch_shapes=scratch_shapes,
        ),
        compiler_params=pltpu.CompilerParams(
            dimension_semantics=dim_sem,
            vmem_limit_bytes=vmem_limit,
        ),
        cost_estimate=cost,
    )(xc, w1c, b1p, w2c, b2p)

    out2 = out2[:M]
    return out2.reshape(orig_shape)


def _reference(x, w1, b1, w2, b2):
    h = jnp.dot(x, w1) + b1
    h = _gelu_tanh(h)
    return jnp.dot(h, w2) + b2


if __name__ == "__main__":
    # Module config: embed_dim=32, exp_ratio=4.0 -> hidden_dim=128, bias=True, drop_rate=0.0
    B, S, E = 2, 8, 32
    H = int(E * 4.0)

    key = jax.random.PRNGKey(0)
    kx, k1, k2, k3, k4 = jax.random.split(key, 5)

    x = jax.random.normal(kx, (B, S, E), dtype=jnp.float32)

    # nn.Linear-style init (uniform(-1/sqrt(fan_in), 1/sqrt(fan_in))).  PyTorch stores weight as
    # (out, in); we store the transpose (in, out) so the kernel computes x @ W + b == x @ W_pt.T + b.
    lim1 = 1.0 / math.sqrt(E)
    lim2 = 1.0 / math.sqrt(H)
    w1 = jax.random.uniform(k1, (E, H), jnp.float32, -lim1, lim1)
    b1 = jax.random.uniform(k2, (H,), jnp.float32, -lim1, lim1)
    w2 = jax.random.uniform(k3, (H, E), jnp.float32, -lim2, lim2)
    b2 = jax.random.uniform(k4, (E,), jnp.float32, -lim2, lim2)

    out = mlp_forward(x, w1, b1, w2, b2)
    out = jax.block_until_ready(out)

    ref = _reference(x, w1, b1, w2, b2)
    assert out.shape == (B, S, E)
    # Matmuls run in bf16 (f32 accumulation) vs. the f32 reference -> loosened tolerance.
    assert jnp.allclose(out, ref, atol=5e-2, rtol=5e-2), "mismatch vs reference"

    # TODO(synk): for E < 128 at very large M, a lane-dense (M*E//128, 128) output layout would
    # remove masked vst.msk stores; skipped because it needs an in-kernel relayout around the
    # matmuls and typical embed dims (E >= 128) are already lane-dense.

    print("KERNEL_OK")
</pallas_src>

<mosaic_0001>
module attributes {stable_mosaic.version = 11 : i64} {
  func.func @mlp_kernel_resident(%arg0: i32, %arg1: memref<16x32xbf16, #tpu.memory_space<vmem>>, %arg2: memref<32x128xbf16, #tpu.memory_space<vmem>>, %arg3: memref<1x128xf32, #tpu.memory_space<vmem>>, %arg4: memref<128x32xbf16, #tpu.memory_space<vmem>>, %arg5: memref<1x32xf32, #tpu.memory_space<vmem>>, %arg6: memref<16x32xf32, #tpu.memory_space<vmem>>) attributes {dimension_semantics = [#tpu.dimension_semantics<parallel>], iteration_bounds = array<i64: 1>, scalar_prefetch = 0 : i64, scratch_operands = 0 : i64, tpu.core_type = #tpu.core_type<tc>, window_params = [{transform_indices = @transform_0, window_bounds = array<i64: 16, 32>}, {pipeline_mode = #tpu.pipeline_mode<synchronous>, transform_indices = @transform_1, window_bounds = array<i64: 32, 128>}, {pipeline_mode = #tpu.pipeline_mode<synchronous>, transform_indices = @transform_2, window_bounds = array<i64: 1, 128>}, {pipeline_mode = #tpu.pipeline_mode<synchronous>, transform_indices = @transform_3, window_bounds = array<i64: 128, 32>}, {pipeline_mode = #tpu.pipeline_mode<synchronous>, transform_indices = @transform_4, window_bounds = array<i64: 1, 32>}, {transform_indices = @transform_5, window_bounds = array<i64: 16, 32>}]} {
    %c0 = arith.constant 0 : index
    %c0_0 = arith.constant 0 : index
    %0 = vector.load %arg1[%c0, %c0_0] : memref<16x32xbf16, #tpu.memory_space<vmem>>, vector<16x32xbf16>
    %c0_1 = arith.constant 0 : index
    %c0_2 = arith.constant 0 : index
    %1 = vector.load %arg2[%c0_1, %c0_2] : memref<32x128xbf16, #tpu.memory_space<vmem>>, vector<32x128xbf16>
    %cst = arith.constant dense<0.000000e+00> : vector<16x128xf32>
    %2 = tpu.matmul %0, %1, %cst {dimension_numbers = #tpu.dot_dimension_numbers<[1], [0], [0], [1], [0, 0, 1, 1], [], []>} : vector<16x32xbf16>, vector<32x128xbf16>, vector<16x128xf32> -> vector<16x128xf32>
    %c0_3 = arith.constant 0 : index
    %c0_4 = arith.constant 0 : index
    %3 = vector.load %arg3[%c0_3, %c0_4] : memref<1x128xf32, #tpu.memory_space<vmem>>, vector<1x128xf32>
    %4 = vector.broadcast %3 : vector<1x128xf32> to vector<16x128xf32>
    %5 = arith.addf %2, %4 : vector<16x128xf32>
    %6 = arith.mulf %5, %5 : vector<16x128xf32>
    %cst_5 = arith.constant 5.000000e-01 : f32
    %7 = vector.broadcast %cst_5 : f32 to vector<16x128xf32>
    %8 = arith.mulf %7, %5 : vector<16x128xf32>
    %9 = arith.mulf %5, %6 : vector<16x128xf32>
    %cst_6 = arith.constant 4.471500e-02 : f32
    %10 = vector.broadcast %cst_6 : f32 to vector<16x128xf32>
    %11 = arith.mulf %10, %9 : vector<16x128xf32>
    %12 = arith.addf %5, %11 : vector<16x128xf32>
    %cst_7 = arith.constant 0.797884583 : f32
    %13 = vector.broadcast %cst_7 : f32 to vector<16x128xf32>
    %14 = arith.mulf %13, %12 : vector<16x128xf32>
    %15 = math.tanh %14 : vector<16x128xf32>
    %cst_8 = arith.constant 1.000000e+00 : f32
    %16 = vector.broadcast %cst_8 : f32 to vector<16x128xf32>
    %17 = arith.addf %16, %15 : vector<16x128xf32>
    %18 = arith.mulf %8, %17 : vector<16x128xf32>
    %19 = arith.truncf %18 : vector<16x128xf32> to vector<16x128xbf16>
    %c0_9 = arith.constant 0 : index
    %c0_10 = arith.constant 0 : index
    %20 = vector.load %arg4[%c0_9, %c0_10] : memref<128x32xbf16, #tpu.memory_space<vmem>>, vector<128x32xbf16>
    %cst_11 = arith.constant dense<0.000000e+00> : vector<16x32xf32>
    %21 = tpu.matmul %19, %20, %cst_11 {dimension_numbers = #tpu.dot_dimension_numbers<[1], [0], [0], [1], [0, 0, 1, 1], [], []>} : vector<16x128xbf16>, vector<128x32xbf16>, vector<16x32xf32> -> vector<16x32xf32>
    %c0_12 = arith.constant 0 : index
    %c0_13 = arith.constant 0 : index
    %22 = vector.load %arg5[%c0_12, %c0_13] : memref<1x32xf32, #tpu.memory_space<vmem>>, vector<1x32xf32>
    %23 = vector.broadcast %22 : vector<1x32xf32> to vector<16x32xf32>
    %24 = arith.addf %21, %23 : vector<16x32xf32>
    %c0_14 = arith.constant 0 : index
    %c0_15 = arith.constant 0 : index
    %25 = vector.load %arg6[%c0_14, %c0_15] : memref<16x32xf32, #tpu.memory_space<vmem>>, vector<16x32xf32>
    tpu.vector_store %arg6[%c0_14, %c0_15], %24 {strides = array<i32>} : memref<16x32xf32, #tpu.memory_space<vmem>>, vector<16x32xf32>,
    return
  }
  func.func @transform_0(%arg0: i32) -> (i32, i32) {
    %c0_i32 = arith.constant 0 : i32
    %c0_i32_0 = arith.constant 0 : i32
    return %arg0, %c0_i32 : i32, i32
  }
  func.func @transform_1(%arg0: i32) -> (i32, i32) {
    %c0_i32 = arith.constant 0 : i32
    %c0_i32_0 = arith.constant 0 : i32
    %c0_i32_1 = arith.constant 0 : i32
    return %c0_i32, %c0_i32_0 : i32, i32
  }
  func.func @transform_2(%arg0: i32) -> (i32, i32) {
    %c0_i32 = arith.constant 0 : i32
    %c0_i32_0 = arith.constant 0 : i32
    %c0_i32_1 = arith.constant 0 : i32
    return %c0_i32, %c0_i32_0 : i32, i32
  }
  func.func @transform_3(%arg0: i32) -> (i32, i32) {
    %c0_i32 = arith.constant 0 : i32
    %c0_i32_0 = arith.constant 0 : i32
    %c0_i32_1 = arith.constant 0 : i32
    return %c0_i32, %c0_i32_0 : i32, i32
  }
  func.func @transform_4(%arg0: i32) -> (i32, i32) {
    %c0_i32 = arith.constant 0 : i32
    %c0_i32_0 = arith.constant 0 : i32
    %c0_i32_1 = arith.constant 0 : i32
    return %c0_i32, %c0_i32_0 : i32, i32
  }
  func.func @transform_5(%arg0: i32) -> (i32, i32) {
    %c0_i32 = arith.constant 0 : i32
    %c0_i32_0 = arith.constant 0 : i32
    return %arg0, %c0_i32 : i32, i32
  }
}

</mosaic_0001>

<llo_original>
// kernel: tpu_custom_call.1
$region0: #{tpu_custom_call.1}
  #allocation0 [shape = 'u32[]', space=smem, size = 0x4, offset = 0x4, fixed_abs, tag = 'smem constant byte address 0x4 - core index']
  #allocation1 [shape = 'u32[144,128]{1,0:T(1,128)}', space=vmem, size = 0x12000, scoped, tag = 'internal scratch']
  %s0 = inlined_call_operand.vmem [shape: bf16[16,32], index: 0, kind: input, shape index: {}]
  %s1 = inlined_call_operand.vmem [shape: bf16[32,128], index: 1, kind: input, shape index: {}]
  %s2 = inlined_call_operand.vmem [shape: f32[1,128], index: 2, kind: input, shape index: {}]
  %s3 = inlined_call_operand.vmem [shape: bf16[128,32], index: 3, kind: input, shape index: {}]
  %s4 = inlined_call_operand.vmem [shape: f32[1,32], index: 4, kind: input, shape index: {}]
  %s5 = inlined_call_operand.hbm [shape: f32[16,32], index: 5, kind: output, shape index: {}]
  %s6 = sld [smem:[#allocation0]]
  $region30: #{tpu_custom_call.1} parent=0
    _
  %s8 = ssub.s32 1, %s6
  %s9 = scalar_select 0, %s8, %s6
  $region1: #{tpu_custom_call.1} parent=0
    #allocation2 [shape = 'u8[8192]{0}', space=vmem, size = 0x2000, scoped, tag = 'output window, operand 0, single buffered']
    #allocation3 [shape = 's32[1]{0}', space=sflag, size = 0x4, scoped, tag = 'scoped memory for tpu_custom_call.1']
    %10 = vsyncpa [#allocation3], 0
    // Predicated region
    $region2: #{tpu_custom_call.1} parent=1 // pred_check
      _
    $region3: #{tpu_custom_call.1} parent=1 // pred_check_branch
      %12 = sbr.rel (0) target = $region5
    $region4: #{tpu_custom_call.1} parent=1 // pred_region
      _
    $region5: #{tpu_custom_call.1} parent=1 // pred_fallthru
      _
    // Predicated region
    $region6: #{tpu_custom_call.1} parent=1 // pred_check
      _
    $region7: #{tpu_custom_call.1} parent=1 // pred_check_branch
      %14 = sbr.rel (0) target = $region9
    $region8: #{tpu_custom_call.1} parent=1 // pred_region
      _
    $region9: #{tpu_custom_call.1} parent=1 // pred_fallthru
      _
    // Predicated region
    $region10: #{tpu_custom_call.1} parent=1 // pred_check
      _
    $region11: #{tpu_custom_call.1} parent=1 // pred_check_branch
      %16 = sbr.rel (0) target = $region13
    $region12: #{tpu_custom_call.1} parent=1 // pred_region
      _
    $region13: #{tpu_custom_call.1} parent=1 // pred_fallthru
      _
    // Predicated region
    $region14: #{tpu_custom_call.1} parent=1 // pred_check
      _
    $region15: #{tpu_custom_call.1} parent=1 // pred_check_branch
      %18 = sbr.rel (0) target = $region17
    $region16: #{tpu_custom_call.1} parent=1 // pred_region
      _
    $region17: #{tpu_custom_call.1} parent=1 // pred_fallthru
      _
    // Predicated region
    $region18: #{tpu_custom_call.1} parent=1 // pred_check
      _
    $region19: #{tpu_custom_call.1} parent=1 // pred_check_branch
      %20 = sbr.rel (0) target = $region21
    $region20: #{tpu_custom_call.1} parent=1 // pred_region
      _
    $region21: #{tpu_custom_call.1} parent=1 // pred_fallthru
      _
    %v22 = vld [vmem:[%s0] sm:$0xf]
    %v23 = vld [vmem:[%s0 + $0x4] sm:$0xf]
    %v24 = vld [vmem:[%s1] sm:$0xf]
    %v25 = vld [vmem:[%s1 + $0x4] sm:$0xf]
    %v26 = vld [vmem:[%s1 + $0x8] sm:$0xf]
    %v27 = vld [vmem:[%s1 + $0xc] sm:$0xf]
    %v28 = vld [vmem:[%s2] sm:$0x1]
    %v30 = vlaneseq
    %v31 = vshrl.u32 %v30, 7
    %v32 = vsub.s32 0, %v31
    %v33 = vrot.slane %v28, %v32
    %v37 = vunpack.c.l.b16 %v22
    %v38 = vunpack.c.l.b16 %v23
    %v39 = vpack.c.b16 %v38, %v37
    %v44 = vunpack.c.l.b16 %v24
    %v45 = vunpack.c.l.b16 %v25
    %v46 = vunpack.c.l.b16 %v26
    %v47 = vunpack.c.l.b16 %v27
    %v48 = vpack.c.b16 %v45, %v44
    %v49 = vpack.c.b16 %v47, %v46
    %vm52 = vcmask 261120
    %v54 = vsel %vm52, %v39, 0
    %56 = vmatprep.subr.bf16.mxu0 0
    %57 = vmatpush1.bf16.msra.mxu0 %v48
    %58 = vmatprep.subr.bf16.mxu0 0
    %59 = vmatpush1.bf16.msra.mxu0 %v49
    %60 = vmatprep.subr.bf16.mxu0 0
    %61 = vmatpush1.bf16.msra.mxu0 0
    %62 = vmatprep.subr.bf16.mxu0 0
    %63 = vmatpush1.bf16.msra.mxu0 0
    %64 = vmatprep.subr.bf16.mxu0 0
    %65 = vmatpush1.bf16.msra.mxu0 0
    %66 = vmatprep.subr.bf16.mxu0 0
    %67 = vmatpush1.bf16.msra.mxu0 0
    %68 = vmatprep.subr.bf16.mxu0 0
    %69 = vmatpush1.bf16.msra.mxu0 0
    %70 = vmatprep.subr.bf16.mxu0 0
    %71 = vmatpush1.bf16.msra.mxu0 0
    %72 = vmatprep.subr.bf16.mxu0 0
    %73 = vmatpush1.bf16.msra.mxu0 0
    %74 = vmatprep.subr.bf16.mxu0 0
    %75 = vmatpush1.bf16.msra.mxu0 0
    %76 = vmatprep.subr.bf16.mxu0 0
    %77 = vmatpush1.bf16.msra.mxu0 0
    %78 = vmatprep.subr.bf16.mxu0 0
    %79 = vmatpush1.bf16.msra.mxu0 0
    %80 = vmatprep.subr.bf16.mxu0 0
    %81 = vmatpush1.bf16.msra.mxu0 0
    %82 = vmatprep.subr.bf16.mxu0 0
    %83 = vmatpush1.bf16.msra.mxu0 0
    %84 = vmatprep.subr.bf16.mxu0 0
    %85 = vmatpush1.bf16.msra.mxu0 0
    %86 = vmatprep.subr.bf16.mxu0 0
    %87 = vmatpush1.bf16.msra.mxu0 0
    %88 = vmatprep.mubr.bf16.mxu0 0
    %89 = vmatmul.mubr.bf16.gmra.mrb[0].mxu0 %v54
    %v90 = vpop.f32.mrb[0].mxu0
    %v91 = vadd.f32 %v33, %v90
    %v92 = vpop.f32.mrb[0].mxu0
    %v93 = vpop.f32.mrb[0].mxu0
    %v94 = vadd.f32 %v33, %v93
    %v95 = vpop.f32.mrb[0].mxu0
    %96 = vdwg.mxu0
    %v97 = vmul.f32 %v91, %v91
    %v98 = vmul.f32 %v94, %v94
    %v99 = vmul.f32 %v91, 0.5
    %v100 = vmul.f32 %v94, 0.5
    %v101 = vmul.f32 %v91, %v97
    %v102 = vmul.f32 %v94, %v98
    %v103 = vmul.f32 %v101, 0.044715
    %v104 = vmul.f32 %v102, 0.044715
    %v105 = vadd.f32 %v91, %v103
    %v106 = vadd.f32 %v94, %v104
    %v107 = vmul.f32 %v105, 0.7978846
    %v108 = vmul.f32 %v106, 0.7978846
    %v109 = vtanh.pop %v107
    %v110 = vtanh.pop %v108
    %v111 = vadd.f32 %v109, 1.0
    %v112 = vadd.f32 %v110, 1.0
    %v113 = vmul.f32 %v99, %v111
    %v114 = vmul.f32 %v100, %v112
    %v115 = vpack.c.bf16 %v114, %v113
    %v116 = vld [vmem:[%s3] sm:$0xf]
    %v117 = vld [vmem:[%s3 + $0x4] sm:$0xf]
    %v118 = vld [vmem:[%s3 + $0x8] sm:$0xf]
    %v119 = vld [vmem:[%s3 + $0xc] sm:$0xf]
    %v120 = vld [vmem:[%s3 + $0x10] sm:$0xf]
    %v121 = vld [vmem:[%s3 + $0x14] sm:$0xf]
    %v122 = vld [vmem:[%s3 + $0x18] sm:$0xf]
    %v123 = vld [vmem:[%s3 + $0x1c] sm:$0xf]
    %v124 = vld [vmem:[%s3 + $0x20] sm:$0xf]
    %v125 = vld [vmem:[%s3 + $0x24] sm:$0xf]
    %v126 = vld [vmem:[%s3 + $0x28] sm:$0xf]
    %v127 = vld [vmem:[%s3 + $0x2c] sm:$0xf]
    %v128 = vld [vmem:[%s3 + $0x30] sm:$0xf]
    %v129 = vld [vmem:[%s3 + $0x34] sm:$0xf]
    %v130 = vld [vmem:[%s3 + $0x38] sm:$0xf]
    %v131 = vld [vmem:[%s3 + $0x3c] sm:$0xf]
    %v132 = vld [vmem:[%s4] sm:$0x1]
    %v134 = vlaneseq
    %v135 = vshrl.u32 %v134, 7
    %v136 = vsub.s32 0, %v135
    %v137 = vrot.slane %v132, %v136
    %v155 = vunpack.c.l.b16 %v116
    %v156 = vunpack.c.l.b16 %v117
    %v157 = vunpack.c.l.b16 %v118
    %v158 = vunpack.c.l.b16 %v119
    %v159 = vunpack.c.l.b16 %v120
    %v160 = vunpack.c.l.b16 %v121
    %v161 = vunpack.c.l.b16 %v122
    %v162 = vunpack.c.l.b16 %v123
    %v163 = vunpack.c.l.b16 %v124
    %v164 = vunpack.c.l.b16 %v125
    %v165 = vunpack.c.l.b16 %v126
    %v166 = vunpack.c.l.b16 %v127
    %v167 = vunpack.c.l.b16 %v128
    %v168 = vunpack.c.l.b16 %v129
    %v169 = vunpack.c.l.b16 %v130
    %v170 = vunpack.c.l.b16 %v131
    %v171 = vpack.c.b16 %v156, %v155
    %v172 = vpack.c.b16 %v158, %v157
    %v173 = vpack.c.b16 %v160, %v159
    %v174 = vpack.c.b16 %v162, %v161
    %v175 = vpack.c.b16 %v164, %v163
    %v176 = vpack.c.b16 %v166, %v165
    %v177 = vpack.c.b16 %v168, %v167
    %v178 = vpack.c.b16 %v170, %v169
    %187 = vmatprep.subr.bf16.mxu0 0
    %188 = vmatpush1.bf16.msra.mxu0 %v171
    %189 = vmatprep.subr.bf16.mxu0 0
    %190 = vmatpush1.bf16.msra.mxu0 %v172
    %191 = vmatprep.subr.bf16.mxu0 0
    %192 = vmatpush1.bf16.msra.mxu0 %v173
    %193 = vmatprep.subr.bf16.mxu0 0
    %194 = vmatpush1.bf16.msra.mxu0 %v174
    %195 = vmatprep.subr.bf16.mxu0 0
    %196 = vmatpush1.bf16.msra.mxu0 %v175
    %197 = vmatprep.subr.bf16.mxu0 0
    %198 = vmatpush1.bf16.msra.mxu0 %v176
    %199 = vmatprep.subr.bf16.mxu0 0
    %200 = vmatpush1.bf16.msra.mxu0 %v177
    %201 = vmatprep.subr.bf16.mxu0 0
    %202 = vmatpush1.bf16.msra.mxu0 %v178
    %203 = vmatprep.subr.bf16.mxu0 0
    %204 = vmatpush1.bf16.msra.mxu0 0
    %205 = vmatprep.subr.bf16.mxu0 0
    %206 = vmatpush1.bf16.msra.mxu0 0
    %207 = vmatprep.subr.bf16.mxu0 0
    %208 = vmatpush1.bf16.msra.mxu0 0
    %209 = vmatprep.subr.bf16.mxu0 0
    %210 = vmatpush1.bf16.msra.mxu0 0
    %211 = vmatprep.subr.bf16.mxu0 0
    %212 = vmatpush1.bf16.msra.mxu0 0
    %213 = vmatprep.subr.bf16.mxu0 0
    %214 = vmatpush1.bf16.msra.mxu0 0
    %215 = vmatprep.subr.bf16.mxu0 0
    %216 = vmatpush1.bf16.msra.mxu0 0
    %217 = vmatprep.subr.bf16.mxu0 0
    %218 = vmatpush1.bf16.msra.mxu0 0
    %219 = vmatprep.mubr.bf16.mxu0 0
    %220 = vmatmul.mubr.bf16.gmra.mrb[0].mxu0 %v115
    %v221 = vpop.f32.mrb[0].mxu0
    %v222 = vadd.f32 %v137, %v221
    %v223 = vpop.f32.mrb[0].mxu0
    %v224 = vpop.f32.mrb[0].mxu0
    %v225 = vadd.f32 %v137, %v224
    %v226 = vpop.f32.mrb[0].mxu0
    %227 = vdwg.mxu0
    %228 = vst.msk [vmem:[#allocation2] sm:$0xff] %vm52, %v222
    %229 = vst.msk [vmem:[#allocation2 + $0x8] sm:$0xff] %vm52, %v225
    // Predicated region
    $region22: #{tpu_custom_call.1} parent=1 // pred_check
      _
    $region23: #{tpu_custom_call.1} parent=1 // pred_check_branch
      %231 = sbr.rel (0) target = $region25
    $region24: #{tpu_custom_call.1} parent=1 // pred_region
      %s233 = ssub.s32 256, 256
      %234 = vsyncadd [#allocation3], %s233
      %s235 = sshll.u32 [#allocation2], 4
      %s236 = int_to_ptr.vmem [resolvable:$true] %s235
      %241 = dma.vmem_to_hbm [thread:$0]  %s236, 256, %s5, [#allocation3], 128, 128, 8
    $region25: #{tpu_custom_call.1} parent=1 // pred_fallthru
      _
    // Predicated region
    $region26: #{tpu_custom_call.1} parent=1 // pred_check
      _
    $region27: #{tpu_custom_call.1} parent=1 // pred_check_branch
      %243 = sbr.rel (0) target = $region29
    $region28: #{tpu_custom_call.1} parent=1 // pred_region
      %244 = dma.done [#allocation3], 256
    $region29: #{tpu_custom_call.1} parent=1 // pred_fallthru
      _
    %245 = vsyncpa [#allocation3], 1

</llo_original>
